<compile_context>
chip_gen: v7x
topology: tpu7x:2x2x1
jax: 0.10.0
libtpu: 0.0.40
codegen_flags: <defaults>
</compile_context>

<pallas_src>
import jax
import jax.numpy as jnp
from jax import lax
from jax.experimental import pallas as pl
from jax.experimental.pallas import tpu as pltpu  # noqa: F401  (TPU backend assumed)

# ----- hyper-parameters (match the module's hyp dict) -----
HIDDEN = 32
NUM_HEADS = 4
HEAD_DIM = HIDDEN // NUM_HEADS
BATCH = 2
SEQ = 8
BS = BATCH * SEQ
INV_SCALE = 1.0 / (HEAD_DIM ** 0.5)      # 1 / sqrt(hidden / num_heads)
NEG_BIG = -1000000000.0                  # make_mask_low_prob constant

assert SEQ & (SEQ - 1) == 0, "SEQ must be a power of two (batch id via shift)"
SEQ_SHIFT = SEQ.bit_length() - 1
assert 3 * HIDDEN + HIDDEN == 128, "packed weight/bias slabs are exactly 128 lanes"


def _local_attn_kernel(x_ref, mask_ref, w_ref, b_ref, o_ref):
    # x_ref:    (B*S, H)   f32   all tokens of all batch elements, batch-major flatten
    # mask_ref: (1, B*S)   f32   seq_mask flattened the same way (1.0 keep / 0.0 pad)
    # w_ref:    (H, 4H)    bf16  [ w_qkv (H,3H) | w_res (H,H) ]   -- 128 lanes, unmasked
    # b_ref:    (1, 4H)    f32   [ b_qkv (3H)   | b_res (H)   ]   -- 128 lanes, unmasked
    # o_ref:    (B*S, H)   f32
    x = x_ref[...]
    w = w_ref[...]
    b = b_ref[...]
    w_qkv = w[:, :3 * HIDDEN]                     # (H, 3H) bf16
    w_res = w[:, 3 * HIDDEN:]                     # (H, H)  bf16
    b_qkv = b[:, :3 * HIDDEN]                     # (1, 3H) f32
    b_res = b[:, 3 * HIDDEN:]                     # (1, H)  f32

    # ONE fused QKV projection for every token of every batch element.
    # bf16 operands, f32 accumulation; bias add stays on the VPU in f32.
    qkv = jnp.dot(x.astype(jnp.bfloat16), w_qkv,
                  preferred_element_type=jnp.float32) + b_qkv          # (BS, 3H) f32

    # Cast once for the attention einsums (MXU operands), then split q/k/v.
    qkv_b = qkv.astype(jnp.bfloat16)
    q = qkv_b[:, :HIDDEN]
    k = qkv_b[:, HIDDEN:2 * HIDDEN]
    v = qkv_b[:, 2 * HIDDEN:]

    # Head split: static 8-lane slices stacked on a new leading (head) axis.
    def heads(t):
        return jnp.stack(
            [t[:, h * HEAD_DIM:(h + 1) * HEAD_DIM] for h in range(NUM_HEADS)], axis=0)

    qh, kh, vh = heads(q), heads(k), heads(v)                          # (NH, BS, HD)

    # Head-batched scores; contracts the last dim of both operands (no transpose).
    att = jnp.einsum("hqd,hkd->hqk", qh, kh,
                     preferred_element_type=jnp.float32) * INV_SCALE   # (NH, BS, BS) f32

    # Fused mask on the flattened token axis: causal AND same-batch (block-diagonal)
    # AND key-position-valid.  Additive form matches the reference exactly:
    # kept entries get +0, masked entries get -1e9.  All f32 VPU math.
    q_idx = lax.broadcasted_iota(jnp.int32, (BS, BS), 0)
    k_idx = lax.broadcasted_iota(jnp.int32, (BS, BS), 1)
    same_batch = (q_idx >> SEQ_SHIFT) == (k_idx >> SEQ_SHIFT)
    causal = k_idx <= q_idx
    keep = causal & same_batch & (mask_ref[...] > 0.0)                 # (BS, BS)
    add_mask = jnp.where(keep, jnp.float32(0.0), jnp.float32(NEG_BIG))
    att = att + add_mask[None, :, :]

    # Numerically-stable softmax with an EXACT divide (f32).
    m = jnp.max(att, axis=-1, keepdims=True)
    e = jnp.exp(att - m)
    denom = jnp.sum(e, axis=-1, keepdims=True)
    p = e / denom                                   # att_drop: identity (eval mode)

    # Head-batched attention-weighted values (bf16 MXU operands, f32 accumulate),
    # then concat heads back to (BS, H).
    ov = jnp.einsum("hqk,hkd->hqd", p.astype(jnp.bfloat16), vh,
                    preferred_element_type=jnp.float32)                # (NH, BS, HD)
    val = jnp.concatenate([ov[h] for h in range(NUM_HEADS)], axis=-1)  # (BS, H) f32

    # ONE fused output projection.                  res_drop: identity (eval mode)
    out = jnp.dot(val.astype(jnp.bfloat16), w_res,
                  preferred_element_type=jnp.float32) + b_res
    o_ref[...] = out.astype(o_ref.dtype)


def local_attention_layer(x, seq_mask, w_qkv, b_qkv, w_res, b_res):
    """x: [B,S,H] f32, seq_mask: [B,S] (1 keep / 0 pad). Returns [B,S,H]."""
    B, S, H = x.shape
    assert (B, S, H) == (BATCH, SEQ, HIDDEN)

    x2 = x.reshape(B * S, H)                               # leading-dim flatten: free
    mask2 = seq_mask.reshape(1, B * S).astype(jnp.float32)

    # Lane-dense parameter packing: one (H, 4H)=(32,128) bf16 weight slab and one
    # (1, 4H)=(1,128) f32 bias row -> 4 input DMAs total, all unmasked.
    w_packed = jnp.concatenate([w_qkv, w_res], axis=1).astype(jnp.bfloat16)   # (H, 4H)
    b_packed = jnp.concatenate([b_qkv, b_res], axis=0).reshape(1, 4 * H)      # (1, 4H)
    b_packed = b_packed.astype(jnp.float32)

    out = pl.pallas_call(
        _local_attn_kernel,
        out_shape=jax.ShapeDtypeStruct((B * S, H), x.dtype),
        # Single program, whole arrays resident in VMEM (~10 KiB total):
        # no grid, default full-array BlockSpecs, no tiling/pipelining machinery.
    )(x2, mask2, w_packed, b_packed)
    return out.reshape(B, S, H)


def _reference(x, seq_mask, w_qkv, b_qkv, w_res, b_res):
    """Pure-JAX f32 replica of the PyTorch forward (eval mode), for verification."""
    B, S, H = x.shape
    qkv = x @ w_qkv + b_qkv
    q, k, v = jnp.split(qkv, 3, axis=-1)

    def split_heads(t):  # [B,S,H] -> [B,nh,S,hd]
        return t.reshape(B, S, NUM_HEADS, HEAD_DIM).transpose(0, 2, 1, 3)

    qh, kh, vh = split_heads(q), split_heads(k), split_heads(v)
    att = jnp.einsum("bhqd,bhkd->bhqk", qh, kh) / jnp.sqrt(jnp.float32(HEAD_DIM))
    tril = jnp.tril(jnp.ones((S, S), jnp.float32))
    mask = tril[None, None] * seq_mask[:, None, None, :]
    att = att + (1.0 - mask) * NEG_BIG
    p = jax.nn.softmax(att, axis=-1)
    val = jnp.einsum("bhqk,bhkd->bhqd", p, vh).transpose(0, 2, 1, 3).reshape(B, S, H)
    return val @ w_res + b_res


if __name__ == "__main__":
    key = jax.random.PRNGKey(0)
    kx, k1, k2, k3, k4 = jax.random.split(key, 5)

    x = jax.random.normal(kx, (BATCH, SEQ, HIDDEN), jnp.float32)

    # Deterministic synthetic parameters (stored as [in, out], i.e. Linear weight^T).
    w_qkv = jax.random.normal(k1, (HIDDEN, 3 * HIDDEN), jnp.float32) * 0.05
    b_qkv = jax.random.normal(k2, (3 * HIDDEN,), jnp.float32) * 0.05
    w_res = jax.random.normal(k3, (HIDDEN, HIDDEN), jnp.float32) * 0.05
    b_res = jax.random.normal(k4, (HIDDEN,), jnp.float32) * 0.05

    # seq_mask: batch 0 fully valid, batch 1 has the last 2 positions padded out.
    seq_mask = jnp.array(
        [[1.0] * SEQ, [1.0] * (SEQ - 2) + [0.0, 0.0]], dtype=jnp.float32
    )

    out = local_attention_layer(x, seq_mask, w_qkv, b_qkv, w_res, b_res)
    out = jax.block_until_ready(out)

    ref = _reference(x, seq_mask, w_qkv, b_qkv, w_res, b_res)
    assert out.shape == (BATCH, SEQ, HIDDEN)
    # Tolerance widened deliberately for the bf16 MXU operands (weights + cast
    # activations) vs the pure-f32 reference; softmax itself is exact f32 now.
    # Observed error is ~1e-3; 1e-2 leaves comfortable margin.
    assert jnp.allclose(out, ref, atol=1e-2, rtol=1e-2), "mismatch vs pure-JAX reference"

    print("KERNEL_OK")
</pallas_src>

<mosaic_0001>
module attributes {stable_mosaic.version = 11 : i64} {
  func.func @_local_attn_kernel(%arg0: memref<16x32xf32, #tpu.memory_space<vmem>>, %arg1: memref<1x16xf32, #tpu.memory_space<vmem>>, %arg2: memref<32x128xbf16, #tpu.memory_space<vmem>>, %arg3: memref<1x128xf32, #tpu.memory_space<vmem>>, %arg4: memref<16x32xf32, #tpu.memory_space<vmem>>) attributes {dimension_semantics = [], scalar_prefetch = 0 : i64, scratch_operands = 0 : i64, tpu.core_type = #tpu.core_type<tc>} {
    %c0 = arith.constant 0 : index
    %c0_0 = arith.constant 0 : index
    %0 = vector.load %arg0[%c0, %c0_0] : memref<16x32xf32, #tpu.memory_space<vmem>>, vector<16x32xf32>
    %c0_1 = arith.constant 0 : index
    %c0_2 = arith.constant 0 : index
    %1 = vector.load %arg2[%c0_1, %c0_2] : memref<32x128xbf16, #tpu.memory_space<vmem>>, vector<32x128xbf16>
    %c0_3 = arith.constant 0 : index
    %c0_4 = arith.constant 0 : index
    %2 = vector.load %arg3[%c0_3, %c0_4] : memref<1x128xf32, #tpu.memory_space<vmem>>, vector<1x128xf32>
    %3 = vector.extract_strided_slice %1 {offsets = [0, 0], sizes = [32, 96], strides = [1, 1]} : vector<32x128xbf16> to vector<32x96xbf16>
    %4 = vector.extract_strided_slice %1 {offsets = [0, 96], sizes = [32, 32], strides = [1, 1]} : vector<32x128xbf16> to vector<32x32xbf16>
    %5 = vector.extract_strided_slice %2 {offsets = [0, 0], sizes = [1, 96], strides = [1, 1]} : vector<1x128xf32> to vector<1x96xf32>
    %6 = vector.extract_strided_slice %2 {offsets = [0, 96], sizes = [1, 32], strides = [1, 1]} : vector<1x128xf32> to vector<1x32xf32>
    %7 = arith.truncf %0 : vector<16x32xf32> to vector<16x32xbf16>
    %cst = arith.constant dense<0.000000e+00> : vector<16x96xf32>
    %8 = tpu.matmul %7, %3, %cst {dimension_numbers = #tpu.dot_dimension_numbers<[1], [0], [0], [1], [0, 0, 1, 1], [], []>} : vector<16x32xbf16>, vector<32x96xbf16>, vector<16x96xf32> -> vector<16x96xf32>
    %9 = vector.broadcast %5 : vector<1x96xf32> to vector<16x96xf32>
    %10 = arith.addf %8, %9 : vector<16x96xf32>
    %11 = arith.truncf %10 : vector<16x96xf32> to vector<16x96xbf16>
    %12 = vector.extract_strided_slice %11 {offsets = [0, 0], sizes = [16, 32], strides = [1, 1]} : vector<16x96xbf16> to vector<16x32xbf16>
    %13 = vector.extract_strided_slice %11 {offsets = [0, 32], sizes = [16, 32], strides = [1, 1]} : vector<16x96xbf16> to vector<16x32xbf16>
    %14 = vector.extract_strided_slice %11 {offsets = [0, 64], sizes = [16, 32], strides = [1, 1]} : vector<16x96xbf16> to vector<16x32xbf16>
    %15 = vector.extract_strided_slice %12 {offsets = [0, 0], sizes = [16, 8], strides = [1, 1]} : vector<16x32xbf16> to vector<16x8xbf16>
    %16 = vector.extract_strided_slice %12 {offsets = [0, 8], sizes = [16, 8], strides = [1, 1]} : vector<16x32xbf16> to vector<16x8xbf16>
    %17 = vector.extract_strided_slice %12 {offsets = [0, 16], sizes = [16, 8], strides = [1, 1]} : vector<16x32xbf16> to vector<16x8xbf16>
    %18 = vector.extract_strided_slice %12 {offsets = [0, 24], sizes = [16, 8], strides = [1, 1]} : vector<16x32xbf16> to vector<16x8xbf16>
    %19 = vector.shape_cast %15 : vector<16x8xbf16> to vector<1x16x8xbf16>
    %20 = vector.shape_cast %16 : vector<16x8xbf16> to vector<1x16x8xbf16>
    %21 = vector.shape_cast %17 : vector<16x8xbf16> to vector<1x16x8xbf16>
    %22 = vector.shape_cast %18 : vector<16x8xbf16> to vector<1x16x8xbf16>
    %23 = tpu.concatenate %19, %20, %21, %22 in 0 : vector<1x16x8xbf16>, vector<1x16x8xbf16>, vector<1x16x8xbf16>, vector<1x16x8xbf16> -> vector<4x16x8xbf16>
    %24 = vector.extract_strided_slice %13 {offsets = [0, 0], sizes = [16, 8], strides = [1, 1]} : vector<16x32xbf16> to vector<16x8xbf16>
    %25 = vector.extract_strided_slice %13 {offsets = [0, 8], sizes = [16, 8], strides = [1, 1]} : vector<16x32xbf16> to vector<16x8xbf16>
    %26 = vector.extract_strided_slice %13 {offsets = [0, 16], sizes = [16, 8], strides = [1, 1]} : vector<16x32xbf16> to vector<16x8xbf16>
    %27 = vector.extract_strided_slice %13 {offsets = [0, 24], sizes = [16, 8], strides = [1, 1]} : vector<16x32xbf16> to vector<16x8xbf16>
    %28 = vector.shape_cast %24 : vector<16x8xbf16> to vector<1x16x8xbf16>
    %29 = vector.shape_cast %25 : vector<16x8xbf16> to vector<1x16x8xbf16>
    %30 = vector.shape_cast %26 : vector<16x8xbf16> to vector<1x16x8xbf16>
    %31 = vector.shape_cast %27 : vector<16x8xbf16> to vector<1x16x8xbf16>
    %32 = tpu.concatenate %28, %29, %30, %31 in 0 : vector<1x16x8xbf16>, vector<1x16x8xbf16>, vector<1x16x8xbf16>, vector<1x16x8xbf16> -> vector<4x16x8xbf16>
    %33 = vector.extract_strided_slice %14 {offsets = [0, 0], sizes = [16, 8], strides = [1, 1]} : vector<16x32xbf16> to vector<16x8xbf16>
    %34 = vector.extract_strided_slice %14 {offsets = [0, 8], sizes = [16, 8], strides = [1, 1]} : vector<16x32xbf16> to vector<16x8xbf16>
    %35 = vector.extract_strided_slice %14 {offsets = [0, 16], sizes = [16, 8], strides = [1, 1]} : vector<16x32xbf16> to vector<16x8xbf16>
    %36 = vector.extract_strided_slice %14 {offsets = [0, 24], sizes = [16, 8], strides = [1, 1]} : vector<16x32xbf16> to vector<16x8xbf16>
    %37 = vector.shape_cast %33 : vector<16x8xbf16> to vector<1x16x8xbf16>
    %38 = vector.shape_cast %34 : vector<16x8xbf16> to vector<1x16x8xbf16>
    %39 = vector.shape_cast %35 : vector<16x8xbf16> to vector<1x16x8xbf16>
    %40 = vector.shape_cast %36 : vector<16x8xbf16> to vector<1x16x8xbf16>
    %41 = tpu.concatenate %37, %38, %39, %40 in 0 : vector<1x16x8xbf16>, vector<1x16x8xbf16>, vector<1x16x8xbf16>, vector<1x16x8xbf16> -> vector<4x16x8xbf16>
    "tpu.trace_start"() <{level = 10 : i32, message = "hqd,hkd->hqk"}> : () -> ()
    %cst_5 = arith.constant dense<0.000000e+00> : vector<4x16x16xf32>
    %42 = tpu.matmul %23, %32, %cst_5 {dimension_numbers = #tpu.dot_dimension_numbers<[2], [2], [1], [1], [0, 0, 0, 1, 1, 1], [0], [0]>} : vector<4x16x8xbf16>, vector<4x16x8xbf16>, vector<4x16x16xf32> -> vector<4x16x16xf32>
    "tpu.trace_stop"() : () -> ()
    %cst_6 = arith.constant 0.353553385 : f32
    %43 = vector.broadcast %cst_6 : f32 to vector<4x16x16xf32>
    %44 = arith.mulf %42, %43 : vector<4x16x16xf32>
    %45 = tpu.iota {dimensions = array<i32: 0>} : vector<16x16xi32>
    %46 = tpu.iota {dimensions = array<i32: 1>} : vector<16x16xi32>
    %c3_i32 = arith.constant 3 : i32
    %47 = vector.broadcast %c3_i32 : i32 to vector<16x16xi32>
    %48 = arith.shrsi %45, %47 : vector<16x16xi32>
    %c3_i32_7 = arith.constant 3 : i32
    %49 = vector.broadcast %c3_i32_7 : i32 to vector<16x16xi32>
    %50 = arith.shrsi %46, %49 : vector<16x16xi32>
    %51 = arith.cmpi eq, %48, %50 : vector<16x16xi32>
    %52 = arith.cmpi sle, %46, %45 : vector<16x16xi32>
    %53 = arith.andi %52, %51 : vector<16x16xi1>
    %c0_8 = arith.constant 0 : index
    %c0_9 = arith.constant 0 : index
    %54 = vector.load %arg1[%c0_8, %c0_9] : memref<1x16xf32, #tpu.memory_space<vmem>>, vector<1x16xf32>
    %cst_10 = arith.constant 0.000000e+00 : f32
    %55 = vector.broadcast %cst_10 : f32 to vector<1x16xf32>
    %56 = arith.cmpf ogt, %54, %55 : vector<1x16xf32>
    %57 = vector.broadcast %56 : vector<1x16xi1> to vector<16x16xi1>
    %58 = arith.andi %53, %57 : vector<16x16xi1>
    %cst_11 = arith.constant 0.000000e+00 : f32
    %cst_12 = arith.constant -1.000000e+09 : f32
    %59 = vector.broadcast %cst_11 : f32 to vector<16x16xf32>
    %60 = vector.broadcast %cst_12 : f32 to vector<16x16xf32>
    %61 = arith.select %58, %59, %60 : vector<16x16xi1>, vector<16x16xf32>
    %62 = vector.shape_cast %61 : vector<16x16xf32> to vector<1x16x16xf32>
    %63 = vector.broadcast %62 : vector<1x16x16xf32> to vector<4x16x16xf32>
    %64 = arith.addf %44, %63 : vector<4x16x16xf32>
    %cst_13 = arith.constant dense<0xFF800000> : vector<4x16xf32>
    %65 = vector.multi_reduction <maximumf>, %64, %cst_13 [2] : vector<4x16x16xf32> to vector<4x16xf32>
    %66 = vector.shape_cast %65 : vector<4x16xf32> to vector<4x16x1xf32>
    %67 = vector.broadcast %66 : vector<4x16x1xf32> to vector<4x16x16xf32>
    %68 = arith.subf %64, %67 : vector<4x16x16xf32>
    %69 = math.exp %68 : vector<4x16x16xf32>
    %cst_14 = arith.constant dense<0.000000e+00> : vector<4x16xf32>
    %70 = vector.multi_reduction <add>, %69, %cst_14 [2] : vector<4x16x16xf32> to vector<4x16xf32>
    %71 = vector.shape_cast %70 : vector<4x16xf32> to vector<4x16x1xf32>
    %72 = vector.broadcast %71 : vector<4x16x1xf32> to vector<4x16x16xf32>
    %73 = arith.divf %69, %72 : vector<4x16x16xf32>
    %74 = arith.truncf %73 : vector<4x16x16xf32> to vector<4x16x16xbf16>
    "tpu.trace_start"() <{level = 10 : i32, message = "hqk,hkd->hqd"}> : () -> ()
    %cst_15 = arith.constant dense<0.000000e+00> : vector<4x16x8xf32>
    %75 = tpu.matmul %74, %41, %cst_15 {dimension_numbers = #tpu.dot_dimension_numbers<[2], [1], [1], [2], [0, 0, 0, 1, 1, 2], [0], [0]>} : vector<4x16x16xbf16>, vector<4x16x8xbf16>, vector<4x16x8xf32> -> vector<4x16x8xf32>
    "tpu.trace_stop"() : () -> ()
    %76 = vector.extract_strided_slice %75 {offsets = [0, 0, 0], sizes = [1, 16, 8], strides = [1, 1, 1]} : vector<4x16x8xf32> to vector<1x16x8xf32>
    %77 = vector.shape_cast %76 : vector<1x16x8xf32> to vector<16x8xf32>
    %78 = vector.extract_strided_slice %75 {offsets = [1, 0, 0], sizes = [1, 16, 8], strides = [1, 1, 1]} : vector<4x16x8xf32> to vector<1x16x8xf32>
    %79 = vector.shape_cast %78 : vector<1x16x8xf32> to vector<16x8xf32>
    %80 = vector.extract_strided_slice %75 {offsets = [2, 0, 0], sizes = [1, 16, 8], strides = [1, 1, 1]} : vector<4x16x8xf32> to vector<1x16x8xf32>
    %81 = vector.shape_cast %80 : vector<1x16x8xf32> to vector<16x8xf32>
    %82 = vector.extract_strided_slice %75 {offsets = [3, 0, 0], sizes = [1, 16, 8], strides = [1, 1, 1]} : vector<4x16x8xf32> to vector<1x16x8xf32>
    %83 = vector.shape_cast %82 : vector<1x16x8xf32> to vector<16x8xf32>
    %84 = tpu.concatenate %77, %79, %81, %83 in 1 : vector<16x8xf32>, vector<16x8xf32>, vector<16x8xf32>, vector<16x8xf32> -> vector<16x32xf32>
    %85 = arith.truncf %84 : vector<16x32xf32> to vector<16x32xbf16>
    %cst_16 = arith.constant dense<0.000000e+00> : vector<16x32xf32>
    %86 = tpu.matmul %85, %4, %cst_16 {dimension_numbers = #tpu.dot_dimension_numbers<[1], [0], [0], [1], [0, 0, 1, 1], [], []>} : vector<16x32xbf16>, vector<32x32xbf16>, vector<16x32xf32> -> vector<16x32xf32>
    %87 = vector.broadcast %6 : vector<1x32xf32> to vector<16x32xf32>
    %88 = arith.addf %86, %87 : vector<16x32xf32>
    %c0_17 = arith.constant 0 : index
    %c0_18 = arith.constant 0 : index
    %89 = vector.load %arg4[%c0_17, %c0_18] : memref<16x32xf32, #tpu.memory_space<vmem>>, vector<16x32xf32>
    tpu.vector_store %arg4[%c0_17, %c0_18], %88 {strides = array<i32>} : memref<16x32xf32, #tpu.memory_space<vmem>>, vector<16x32xf32>,
    return
  }
}

</mosaic_0001>

<llo_original>
// kernel: tpu_custom_call.1
$region0: #{tpu_custom_call.1}
  #allocation0 [shape = 'u32[]', space=smem, size = 0x4, offset = 0x4, fixed_abs, tag = 'smem constant byte address 0x4 - core index']
  #allocation1 [shape = 'u32[144,128]{1,0:T(1,128)}', space=vmem, size = 0x12000, scoped, tag = 'internal scratch']
  %s0 = inlined_call_operand.hbm [shape: f32[16,32], index: 0, kind: input, shape index: {}]
  %s1 = inlined_call_operand.vmem [shape: f32[1,16], index: 1, kind: input, shape index: {}]
  %s2 = inlined_call_operand.hbm [shape: bf16[32,128], index: 2, kind: input, shape index: {}]
  %s3 = inlined_call_operand.vmem [shape: f32[1,128], index: 3, kind: input, shape index: {}]
  %s4 = inlined_call_operand.hbm [shape: f32[16,32], index: 4, kind: output, shape index: {}]
  %s5 = sld [smem:[#allocation0]]
  $region34: #{tpu_custom_call.1} parent=0
    _
  %s7 = ssub.s32 1, %s5
  %s8 = scalar_select 0, %s7, %s5
  $region1: #{tpu_custom_call.1} parent=0
    #allocation2 [shape = 'u8[8192]{0}', space=vmem, size = 0x2000, scoped, tag = 'input window, operand 0, single buffered']
    #allocation3 [shape = 's32[1]{0}', space=sflag, size = 0x4, scoped, tag = 'scoped memory for tpu_custom_call.1']
    #allocation4 [shape = 's32[1]{0}', space=sflag, size = 0x4, scoped, tag = 'scoped memory for tpu_custom_call.1']
    #allocation5 [shape = 'u8[8192]{0}', space=vmem, size = 0x2000, scoped, tag = 'input window, operand 2, single buffered']
    #allocation6 [shape = 's32[1]{0}', space=sflag, size = 0x4, scoped, tag = 'scoped memory for tpu_custom_call.1']
    #allocation7 [shape = 'u8[8192]{0}', space=vmem, size = 0x2000, scoped, tag = 'output window, operand 0, single buffered']
    %9 = vsyncpa [#allocation3], 0
    %10 = vsyncpa [#allocation6], 0
    %11 = vsyncpa [#allocation4], 0
    // Predicated region
    $region2: #{tpu_custom_call.1} parent=1 // pred_check
      _
    $region3: #{tpu_custom_call.1} parent=1 // pred_check_branch
      %13 = sbr.rel (0) target = $region5
    $region4: #{tpu_custom_call.1} parent=1 // pred_region
      %s15 = ssub.s32 256, 256
      %16 = vsyncadd [#allocation3], %s15
      %s17 = sshll.u32 [#allocation2], 4
      %s18 = int_to_ptr.vmem [resolvable:$true] %s17
      %23 = dma.hbm_to_vmem [thread:$0]  %s0, 256, %s18, [#allocation3], 128, 128, 8
    $region5: #{tpu_custom_call.1} parent=1 // pred_fallthru
      _
    // Predicated region
    $region6: #{tpu_custom_call.1} parent=1 // pred_check
      _
    $region7: #{tpu_custom_call.1} parent=1 // pred_check_branch
      %25 = sbr.rel (0) target = $region9
    $region8: #{tpu_custom_call.1} parent=1 // pred_region
      _
    $region9: #{tpu_custom_call.1} parent=1 // pred_fallthru
      _
    // Predicated region
    $region10: #{tpu_custom_call.1} parent=1 // pred_check
      _
    $region11: #{tpu_custom_call.1} parent=1 // pred_check_branch
      %27 = sbr.rel (0) target = $region13
    $region12: #{tpu_custom_call.1} parent=1 // pred_region
      %s29 = ssub.s32 256, 256
      %30 = vsyncadd [#allocation6], %s29
      %s31 = sshll.u32 [#allocation5], 4
      %s32 = int_to_ptr.vmem [resolvable:$true] %s31
      %37 = dma.hbm_to_vmem [thread:$0]  %s2, 256, %s32, [#allocation6], 64, 64, 4
    $region13: #{tpu_custom_call.1} parent=1 // pred_fallthru
      _
    // Predicated region
    $region14: #{tpu_custom_call.1} parent=1 // pred_check
      _
    $region15: #{tpu_custom_call.1} parent=1 // pred_check_branch
      %39 = sbr.rel (0) target = $region17
    $region16: #{tpu_custom_call.1} parent=1 // pred_region
      _
    $region17: #{tpu_custom_call.1} parent=1 // pred_fallthru
      _
    // Predicated region
    $region18: #{tpu_custom_call.1} parent=1 // pred_check
      _
    $region19: #{tpu_custom_call.1} parent=1 // pred_check_branch
      %41 = sbr.rel (0) target = $region21
    $region20: #{tpu_custom_call.1} parent=1 // pred_region
      %42 = dma.done [#allocation3], 256
    $region21: #{tpu_custom_call.1} parent=1 // pred_fallthru
      _
    // Predicated region
    $region22: #{tpu_custom_call.1} parent=1 // pred_check
      _
    $region23: #{tpu_custom_call.1} parent=1 // pred_check_branch
      %44 = sbr.rel (0) target = $region25
    $region24: #{tpu_custom_call.1} parent=1 // pred_region
      %45 = dma.done [#allocation6], 256
    $region25: #{tpu_custom_call.1} parent=1 // pred_fallthru
      _
    %v47 = vld [vmem:[#allocation2] sm:$0xff]
    %v48 = vld [vmem:[#allocation2 + $0x8] sm:$0xff]
    %v49 = vld [vmem:[#allocation5] sm:$0xf]
    %v50 = vld [vmem:[#allocation5 + $0x4] sm:$0xf]
    %v51 = vld [vmem:[#allocation5 + $0x8] sm:$0xf]
    %v52 = vld [vmem:[#allocation5 + $0xc] sm:$0xf]
    %v53 = vld [vmem:[%s3] sm:$0x1]
    %v54 = vpack.c.bf16 %v48, %v47
    %v56 = vlaneseq
    %v57 = vshrl.u32 %v56, 7
    %v58 = vsub.s32 0, %v57
    %v59 = vrot.slane %v53, %v58
    %v65 = vunpack.c.l.b16 %v49
    %v66 = vunpack.c.l.b16 %v50
    %v67 = vunpack.c.l.b16 %v51
    %v68 = vunpack.c.l.b16 %v52
    %v69 = vpack.c.b16 %v66, %v65
    %v70 = vpack.c.b16 %v68, %v67
    %vm73 = vcmask 261120
    %v75 = vsel %vm73, %v54, 0
    %77 = vmatprep.subr.bf16.mxu0 0
    %78 = vmatpush1.bf16.msra.mxu0 %v69
    %79 = vmatprep.subr.bf16.mxu0 0
    %80 = vmatpush1.bf16.msra.mxu0 %v70
    %81 = vmatprep.subr.bf16.mxu0 0
    %82 = vmatpush1.bf16.msra.mxu0 0
    %83 = vmatprep.subr.bf16.mxu0 0
    %84 = vmatpush1.bf16.msra.mxu0 0
    %85 = vmatprep.subr.bf16.mxu0 0
    %86 = vmatpush1.bf16.msra.mxu0 0
    %87 = vmatprep.subr.bf16.mxu0 0
    %88 = vmatpush1.bf16.msra.mxu0 0
    %89 = vmatprep.subr.bf16.mxu0 0
    %90 = vmatpush1.bf16.msra.mxu0 0
    %91 = vmatprep.subr.bf16.mxu0 0
    %92 = vmatpush1.bf16.msra.mxu0 0
    %93 = vmatprep.subr.bf16.mxu0 0
    %94 = vmatpush1.bf16.msra.mxu0 0
    %95 = vmatprep.subr.bf16.mxu0 0
    %96 = vmatpush1.bf16.msra.mxu0 0
    %97 = vmatprep.subr.bf16.mxu0 0
    %98 = vmatpush1.bf16.msra.mxu0 0
    %99 = vmatprep.subr.bf16.mxu0 0
    %100 = vmatpush1.bf16.msra.mxu0 0
    %101 = vmatprep.subr.bf16.mxu0 0
    %102 = vmatpush1.bf16.msra.mxu0 0
    %103 = vmatprep.subr.bf16.mxu0 0
    %104 = vmatpush1.bf16.msra.mxu0 0
    %105 = vmatprep.subr.bf16.mxu0 0
    %106 = vmatpush1.bf16.msra.mxu0 0
    %107 = vmatprep.subr.bf16.mxu0 0
    %108 = vmatpush1.bf16.msra.mxu0 0
    %109 = vmatprep.mubr.bf16.mxu0 0
    %110 = vmatmul.mubr.bf16.gmra.mrb[0].mxu0 %v75
    %v111 = vpop.f32.mrb[0].mxu0
    %v112 = vadd.f32 %v59, %v111
    %v113 = vpop.f32.mrb[0].mxu0
    %v114 = vpop.f32.mrb[0].mxu0
    %v115 = vadd.f32 %v59, %v114
    %v116 = vpop.f32.mrb[0].mxu0
    %117 = vdwg.mxu0
    %v118 = vpack.c.bf16 %v115, %v112
    %120 = vrot.lane.b32.xlu0 %v118, 120
    %v121 = vpop.permute.xlu0 %120
    %122 = vrot.lane.b32.xlu0 %v118, 112
    %v123 = vpop.permute.xlu0 %122
    %124 = vrot.lane.b32.xlu0 %v118, 104
    %v125 = vpop.permute.xlu0 %124
    %126 = vrot.lane.b32.xlu0 %v118, 96
    %v127 = vpop.permute.xlu0 %126
    %vm128 = vcmask 64512
    %v130 = vsel %vm128, %v118, 0
    %v133 = vsel %vm128, %v127, 0
    %135 = vmatprep.subr.bf16.mxu0 0
    %136 = vmatpush1.bf16.xpose.msra.mxu0 %v133
    %137 = vmatprep.subr.bf16.mxu0 0
    %138 = vmatpush1.bf16.xpose.msra.mxu0 0
    %139 = vmatprep.subr.bf16.mxu0 0
    %140 = vmatpush1.bf16.xpose.msra.mxu0 0
    %141 = vmatprep.subr.bf16.mxu0 0
    %142 = vmatpush1.bf16.xpose.msra.mxu0 0
    %143 = vmatprep.subr.bf16.mxu0 0
    %144 = vmatpush1.bf16.xpose.msra.mxu0 0
    %145 = vmatprep.subr.bf16.mxu0 0
    %146 = vmatpush1.bf16.xpose.msra.mxu0 0
    %147 = vmatprep.subr.bf16.mxu0 0
    %148 = vmatpush1.bf16.xpose.msra.mxu0 0
    %149 = vmatprep.subr.bf16.mxu0 0
    %150 = vmatpush1.bf16.xpose.msra.mxu0 0
    %151 = vmatprep.subr.bf16.mxu0 0
    %152 = vmatpush1.bf16.xpose.msra.mxu0 0
    %153 = vmatprep.subr.bf16.mxu0 0
    %154 = vmatpush1.bf16.xpose.msra.mxu0 0
    %155 = vmatprep.subr.bf16.mxu0 0
    %156 = vmatpush1.bf16.xpose.msra.mxu0 0
    %157 = vmatprep.subr.bf16.mxu0 0
    %158 = vmatpush1.bf16.xpose.msra.mxu0 0
    %159 = vmatprep.subr.bf16.mxu0 0
    %160 = vmatpush1.bf16.xpose.msra.mxu0 0
    %161 = vmatprep.subr.bf16.mxu0 0
    %162 = vmatpush1.bf16.xpose.msra.mxu0 0
    %163 = vmatprep.subr.bf16.mxu0 0
    %164 = vmatpush1.bf16.xpose.msra.mxu0 0
    %165 = vmatprep.subr.bf16.mxu0 0
    %166 = vmatpush1.bf16.xpose.msra.mxu0 0
    %167 = vmatprep.mubr.bf16.mxu0 0
    %168 = vmatmul.mubr.bf16.gmra.mrb[0].mxu0 %v130
    %v169 = vpop.f32.mrb[0].mxu0
    %v170 = vadd.f32 0.0, %v169
    %v171 = vpop.f32.mrb[0].mxu0
    %v172 = vpop.f32.mrb[0].mxu0
    %v173 = vadd.f32 0.0, %v172
    %v174 = vpop.f32.mrb[0].mxu0
    %175 = vdwg.mxu0
    %176 = vrot.lane.b32.xlu0 %v121, 96
    %v177 = vpop.permute.xlu0 %176
    %v179 = vsel %vm128, %v121, 0
    %v182 = vsel %vm128, %v177, 0
    %184 = vmatprep.subr.bf16.mxu0 0
    %185 = vmatpush1.bf16.xpose.msra.mxu0 %v182
    %186 = vmatprep.subr.bf16.mxu0 0
    %187 = vmatpush1.bf16.xpose.msra.mxu0 0
    %188 = vmatprep.subr.bf16.mxu0 0
    %189 = vmatpush1.bf16.xpose.msra.mxu0 0
    %190 = vmatprep.subr.bf16.mxu0 0
    %191 = vmatpush1.bf16.xpose.msra.mxu0 0
    %192 = vmatprep.subr.bf16.mxu0 0
    %193 = vmatpush1.bf16.xpose.msra.mxu0 0
    %194 = vmatprep.subr.bf16.mxu0 0
    %195 = vmatpush1.bf16.xpose.msra.mxu0 0
    %196 = vmatprep.subr.bf16.mxu0 0
    %197 = vmatpush1.bf16.xpose.msra.mxu0 0
    %198 = vmatprep.subr.bf16.mxu0 0
    %199 = vmatpush1.bf16.xpose.msra.mxu0 0
    %200 = vmatprep.subr.bf16.mxu0 0
    %201 = vmatpush1.bf16.xpose.msra.mxu0 0
    %202 = vmatprep.subr.bf16.mxu0 0
    %203 = vmatpush1.bf16.xpose.msra.mxu0 0
    %204 = vmatprep.subr.bf16.mxu0 0
    %205 = vmatpush1.bf16.xpose.msra.mxu0 0
    %206 = vmatprep.subr.bf16.mxu0 0
    %207 = vmatpush1.bf16.xpose.msra.mxu0 0
    %208 = vmatprep.subr.bf16.mxu0 0
    %209 = vmatpush1.bf16.xpose.msra.mxu0 0
    %210 = vmatprep.subr.bf16.mxu0 0
    %211 = vmatpush1.bf16.xpose.msra.mxu0 0
    %212 = vmatprep.subr.bf16.mxu0 0
    %213 = vmatpush1.bf16.xpose.msra.mxu0 0
    %214 = vmatprep.subr.bf16.mxu0 0
    %215 = vmatpush1.bf16.xpose.msra.mxu0 0
    %216 = vmatprep.mubr.bf16.mxu0 0
    %217 = vmatmul.mubr.bf16.gmra.mrb[0].mxu0 %v179
    %v218 = vpop.f32.mrb[0].mxu0
    %v219 = vadd.f32 0.0, %v218
    %v220 = vpop.f32.mrb[0].mxu0
    %v221 = vpop.f32.mrb[0].mxu0
    %v222 = vadd.f32 0.0, %v221
    %v223 = vpop.f32.mrb[0].mxu0
    %224 = vdwg.mxu0
    %225 = vrot.lane.b32.xlu0 %v123, 96
    %v226 = vpop.permute.xlu0 %225
    %v228 = vsel %vm128, %v123, 0
    %v231 = vsel %vm128, %v226, 0
    %233 = vmatprep.subr.bf16.mxu0 0
    %234 = vmatpush1.bf16.xpose.msra.mxu0 %v231
    %235 = vmatprep.subr.bf16.mxu0 0
    %236 = vmatpush1.bf16.xpose.msra.mxu0 0
    %237 = vmatprep.subr.bf16.mxu0 0
    %238 = vmatpush1.bf16.xpose.msra.mxu0 0
    %239 = vmatprep.subr.bf16.mxu0 0
    %240 = vmatpush1.bf16.xpose.msra.mxu0 0
    %241 = vmatprep.subr.bf16.mxu0 0
    %242 = vmatpush1.bf16.xpose.msra.mxu0 0
    %243 = vmatprep.subr.bf16.mxu0 0
    %244 = vmatpush1.bf16.xpose.msra.mxu0 0
    %245 = vmatprep.subr.bf16.mxu0 0
    %246 = vmatpush1.bf16.xpose.msra.mxu0 0
    %247 = vmatprep.subr.bf16.mxu0 0
    %248 = vmatpush1.bf16.xpose.msra.mxu0 0
    %249 = vmatprep.subr.bf16.mxu0 0
    %250 = vmatpush1.bf16.xpose.msra.mxu0 0
    %251 = vmatprep.subr.bf16.mxu0 0
    %252 = vmatpush1.bf16.xpose.msra.mxu0 0
    %253 = vmatprep.subr.bf16.mxu0 0
    %254 = vmatpush1.bf16.xpose.msra.mxu0 0
    %255 = vmatprep.subr.bf16.mxu0 0
    %256 = vmatpush1.bf16.xpose.msra.mxu0 0
    %257 = vmatprep.subr.bf16.mxu0 0
    %258 = vmatpush1.bf16.xpose.msra.mxu0 0
    %259 = vmatprep.subr.bf16.mxu0 0
    %260 = vmatpush1.bf16.xpose.msra.mxu0 0
    %261 = vmatprep.subr.bf16.mxu0 0
    %262 = vmatpush1.bf16.xpose.msra.mxu0 0
    %263 = vmatprep.subr.bf16.mxu0 0
    %264 = vmatpush1.bf16.xpose.msra.mxu0 0
    %265 = vmatprep.mubr.bf16.mxu0 0
    %266 = vmatmul.mubr.bf16.gmra.mrb[0].mxu0 %v228
    %v267 = vpop.f32.mrb[0].mxu0
    %v268 = vadd.f32 0.0, %v267
    %v269 = vpop.f32.mrb[0].mxu0
    %v270 = vpop.f32.mrb[0].mxu0
    %v271 = vadd.f32 0.0, %v270
    %v272 = vpop.f32.mrb[0].mxu0
    %273 = vdwg.mxu0
    %274 = vrot.lane.b32.xlu0 %v125, 96
    %v275 = vpop.permute.xlu0 %274
    %v277 = vsel %vm128, %v125, 0
    %v280 = vsel %vm128, %v275, 0
    %282 = vmatprep.subr.bf16.mxu0 0
    %283 = vmatpush1.bf16.xpose.msra.mxu0 %v280
    %284 = vmatprep.subr.bf16.mxu0 0
    %285 = vmatpush1.bf16.xpose.msra.mxu0 0
    %286 = vmatprep.subr.bf16.mxu0 0
    %287 = vmatpush1.bf16.xpose.msra.mxu0 0
    %288 = vmatprep.subr.bf16.mxu0 0
    %289 = vmatpush1.bf16.xpose.msra.mxu0 0
    %290 = vmatprep.subr.bf16.mxu0 0
    %291 = vmatpush1.bf16.xpose.msra.mxu0 0
    %292 = vmatprep.subr.bf16.mxu0 0
    %293 = vmatpush1.bf16.xpose.msra.mxu0 0
    %294 = vmatprep.subr.bf16.mxu0 0
    %295 = vmatpush1.bf16.xpose.msra.mxu0 0
    %296 = vmatprep.subr.bf16.mxu0 0
    %297 = vmatpush1.bf16.xpose.msra.mxu0 0
    %298 = vmatprep.subr.bf16.mxu0 0
    %299 = vmatpush1.bf16.xpose.msra.mxu0 0
    %300 = vmatprep.subr.bf16.mxu0 0
    %301 = vmatpush1.bf16.xpose.msra.mxu0 0
    %302 = vmatprep.subr.bf16.mxu0 0
    %303 = vmatpush1.bf16.xpose.msra.mxu0 0
    %304 = vmatprep.subr.bf16.mxu0 0
    %305 = vmatpush1.bf16.xpose.msra.mxu0 0
    %306 = vmatprep.subr.bf16.mxu0 0
    %307 = vmatpush1.bf16.xpose.msra.mxu0 0
    %308 = vmatprep.subr.bf16.mxu0 0
    %309 = vmatpush1.bf16.xpose.msra.mxu0 0
    %310 = vmatprep.subr.bf16.mxu0 0
    %311 = vmatpush1.bf16.xpose.msra.mxu0 0
    %312 = vmatprep.subr.bf16.mxu0 0
    %313 = vmatpush1.bf16.xpose.msra.mxu0 0
    %314 = vmatprep.mubr.bf16.mxu0 0
    %315 = vmatmul.mubr.bf16.gmra.mrb[0].mxu0 %v277
    %v316 = vpop.f32.mrb[0].mxu0
    %v317 = vadd.f32 0.0, %v316
    %v318 = vpop.f32.mrb[0].mxu0
    %v319 = vpop.f32.mrb[0].mxu0
    %v320 = vadd.f32 0.0, %v319
    %v321 = vpop.f32.mrb[0].mxu0
    %322 = vdwg.mxu0
    %v323 = vmul.f32 %v170, 0.35355338
    %v324 = vmul.f32 %v173, 0.35355338
    %v325 = vmul.f32 %v219, 0.35355338
    %v326 = vmul.f32 %v222, 0.35355338
    %v327 = vmul.f32 %v268, 0.35355338
    %v328 = vmul.f32 %v271, 0.35355338
    %v329 = vmul.f32 %v317, 0.35355338
    %v330 = vmul.f32 %v320, 0.35355338
    %v331 = vlaneseq
    %v332 = vshrl.u32 %v331, 7
    %v333 = vadd.s32 %v332, 8
    %v334 = vlaneseq
    %v335 = vand.u32 %v334, 127
    %v336 = vshra.s32 %v332, 3
    %v337 = vshra.s32 %v333, 3
    %v338 = vshra.s32 %v335, 3
    %vm339 = vcmp.eq.s32.totalorder %v336, %v338
    %vm340 = vcmp.eq.s32.totalorder %v337, %v338
    %vm341 = vcmp.le.s32.totalorder %v335, %v332
    %vm342 = vcmp.le.s32.totalorder %v335, %v333
    %vm343 = vmand %vm341, %vm339
    %vm344 = vmand %vm342, %vm340
    %v345 = vld [vmem:[%s1] sm:$0x1]
    %vm346 = vcmp.gt.f32.partialorder %v345, 0.0
    %v347 = vsel %vm346, 1, 0
    %v348 = vlaneseq
    %v349 = vshrl.u32 %v348, 7
    %v350 = vsub.s32 0, %v349
    %v351 = vrot.slane %v347, %v350
    %vm352 = vcmp.eq.s32.totalorder %v351, 1
    %vm353 = vmand %vm343, %vm352
    %vm354 = vmand %vm344, %vm352
    %v355 = vsel %vm353, 0.0, -1e+09
    %v356 = vsel %vm354, 0.0, -1e+09
    %v357 = vadd.f32 %v323, %v355
    %v358 = vadd.f32 %v324, %v356
    %v359 = vadd.f32 %v325, %v355
    %v360 = vadd.f32 %v326, %v356
    %v361 = vadd.f32 %v327, %v355
    %v362 = vadd.f32 %v328, %v356
    %v363 = vadd.f32 %v329, %v355
    %v364 = vadd.f32 %v330, %v356
    %vm365 = vcmask 130048
    %v366 = vsel %vm365, %v357, -inf
    %367 = vmax.xlane.f32.xlu0 %v366
    %v368 = vpop.xlane.xlu0 %367
    %v369 = vsel %vm365, %v358, -inf
    %370 = vmax.xlane.f32.xlu0 %v369
    %v371 = vpop.xlane.xlu0 %370
    %v372 = vsel %vm365, %v359, -inf
    %373 = vmax.xlane.f32.xlu0 %v372
    %v374 = vpop.xlane.xlu0 %373
    %v375 = vsel %vm365, %v360, -inf
    %376 = vmax.xlane.f32.xlu0 %v375
    %v377 = vpop.xlane.xlu0 %376
    %v378 = vsel %vm365, %v361, -inf
    %379 = vmax.xlane.f32.xlu0 %v378
    %v380 = vpop.xlane.xlu0 %379
    %v381 = vsel %vm365, %v362, -inf
    %382 = vmax.xlane.f32.xlu0 %v381
    %v383 = vpop.xlane.xlu0 %382
    %v384 = vsel %vm365, %v363, -inf
    %385 = vmax.xlane.f32.xlu0 %v384
    %v386 = vpop.xlane.xlu0 %385
    %v387 = vsel %vm365, %v364, -inf
    %388 = vmax.xlane.f32.xlu0 %v387
    %v389 = vpop.xlane.xlu0 %388
    %v390 = vsub.f32 %v357, %v368
    %v391 = vsub.f32 %v358, %v371
    %v392 = vsub.f32 %v359, %v374
    %v393 = vsub.f32 %v360, %v377
    %v394 = vsub.f32 %v361, %v380
    %v395 = vsub.f32 %v362, %v383
    %v396 = vsub.f32 %v363, %v386
    %v397 = vsub.f32 %v364, %v389
    %v398 = vmul.f32 %v390, 1.442695
    %v399 = vpow.pop %v398
    %v400 = vmul.f32 %v391, 1.442695
    %v401 = vpow.pop %v400
    %v402 = vmul.f32 %v392, 1.442695
    %v403 = vpow.pop %v402
    %v404 = vmul.f32 %v393, 1.442695
    %v405 = vpow.pop %v404
    %v406 = vmul.f32 %v394, 1.442695
    %v407 = vpow.pop %v406
    %v408 = vmul.f32 %v395, 1.442695
    %v409 = vpow.pop %v408
    %v410 = vmul.f32 %v396, 1.442695
    %v411 = vpow.pop %v410
    %v412 = vmul.f32 %v397, 1.442695
    %v413 = vpow.pop %v412
    %v414 = vsel %vm365, %v399, 0.0
    %415 = vadd.xlane.f32.xlu0 %v414
    %v416 = vpop.xlane.xlu0 %415
    %v417 = vsel %vm365, %v401, 0.0
    %418 = vadd.xlane.f32.xlu0 %v417
    %v419 = vpop.xlane.xlu0 %418
    %v420 = vsel %vm365, %v403, 0.0
    %421 = vadd.xlane.f32.xlu0 %v420
    %v422 = vpop.xlane.xlu0 %421
    %v423 = vsel %vm365, %v405, 0.0
    %424 = vadd.xlane.f32.xlu0 %v423
    %v425 = vpop.xlane.xlu0 %424
    %v426 = vsel %vm365, %v407, 0.0
    %427 = vadd.xlane.f32.xlu0 %v426
    %v428 = vpop.xlane.xlu0 %427
    %v429 = vsel %vm365, %v409, 0.0
    %430 = vadd.xlane.f32.xlu0 %v429
    %v431 = vpop.xlane.xlu0 %430
    %v432 = vsel %vm365, %v411, 0.0
    %433 = vadd.xlane.f32.xlu0 %v432
    %v434 = vpop.xlane.xlu0 %433
    %v435 = vsel %vm365, %v413, 0.0
    %436 = vadd.xlane.f32.xlu0 %v435
    %v437 = vpop.xlane.xlu0 %436
    %v438 = vrcp.pop %v416
    %v439 = vmul.f32 %v399, %v438
    %v440 = vrcp.pop %v419
    %v441 = vmul.f32 %v401, %v440
    %v442 = vrcp.pop %v422
    %v443 = vmul.f32 %v403, %v442
    %v444 = vrcp.pop %v425
    %v445 = vmul.f32 %v405, %v444
    %v446 = vrcp.pop %v428
    %v447 = vmul.f32 %v407, %v446
    %v448 = vrcp.pop %v431
    %v449 = vmul.f32 %v409, %v448
    %v450 = vrcp.pop %v434
    %v451 = vmul.f32 %v411, %v450
    %v452 = vrcp.pop %v437
    %v453 = vmul.f32 %v413, %v452
    %v454 = vpack.c.bf16 %v441, %v439
    %v455 = vpack.c.bf16 %v445, %v443
    %v456 = vpack.c.bf16 %v449, %v447
    %v457 = vpack.c.bf16 %v453, %v451
    %458 = vrot.lane.b32.xlu0 %v118, 64
    %v459 = vpop.permute.xlu0 %458
    %v462 = vsel %vm365, %v454, 0
    %464 = vmatprep.subr.bf16.mxu0 0
    %465 = vmatpush1.bf16.msra.mxu0 %v459
    %466 = vmatprep.subr.bf16.mxu0 0
    %467 = vmatpush1.bf16.msra.mxu0 0
    %468 = vmatprep.subr.bf16.mxu0 0
    %469 = vmatpush1.bf16.msra.mxu0 0
    %470 = vmatprep.subr.bf16.mxu0 0
    %471 = vmatpush1.bf16.msra.mxu0 0
    %472 = vmatprep.subr.bf16.mxu0 0
    %473 = vmatpush1.bf16.msra.mxu0 0
    %474 = vmatprep.subr.bf16.mxu0 0
    %475 = vmatpush1.bf16.msra.mxu0 0
    %476 = vmatprep.subr.bf16.mxu0 0
    %477 = vmatpush1.bf16.msra.mxu0 0
    %478 = vmatprep.subr.bf16.mxu0 0
    %479 = vmatpush1.bf16.msra.mxu0 0
    %480 = vmatprep.subr.bf16.mxu0 0
    %481 = vmatpush1.bf16.msra.mxu0 0
    %482 = vmatprep.subr.bf16.mxu0 0
    %483 = vmatpush1.bf16.msra.mxu0 0
    %484 = vmatprep.subr.bf16.mxu0 0
    %485 = vmatpush1.bf16.msra.mxu0 0
    %486 = vmatprep.subr.bf16.mxu0 0
    %487 = vmatpush1.bf16.msra.mxu0 0
    %488 = vmatprep.subr.bf16.mxu0 0
    %489 = vmatpush1.bf16.msra.mxu0 0
    %490 = vmatprep.subr.bf16.mxu0 0
    %491 = vmatpush1.bf16.msra.mxu0 0
    %492 = vmatprep.subr.bf16.mxu0 0
    %493 = vmatpush1.bf16.msra.mxu0 0
    %494 = vmatprep.subr.bf16.mxu0 0
    %495 = vmatpush1.bf16.msra.mxu0 0
    %496 = vmatprep.mubr.bf16.mxu0 0
    %497 = vmatmul.mubr.bf16.gmra.mrb[0].mxu0 %v462
    %v498 = vpop.f32.mrb[0].mxu0
    %v499 = vadd.f32 0.0, %v498
    %v500 = vpop.f32.mrb[0].mxu0
    %v501 = vpop.f32.mrb[0].mxu0
    %v502 = vadd.f32 0.0, %v501
    %v503 = vpop.f32.mrb[0].mxu0
    %504 = vdwg.mxu0
    %505 = vrot.lane.b32.xlu0 %v121, 64
    %v506 = vpop.permute.xlu0 %505
    %v509 = vsel %vm365, %v455, 0
    %511 = vmatprep.subr.bf16.mxu0 0
    %512 = vmatpush1.bf16.msra.mxu0 %v506
    %513 = vmatprep.subr.bf16.mxu0 0
    %514 = vmatpush1.bf16.msra.mxu0 0
    %515 = vmatprep.subr.bf16.mxu0 0
    %516 = vmatpush1.bf16.msra.mxu0 0
    %517 = vmatprep.subr.bf16.mxu0 0
    %518 = vmatpush1.bf16.msra.mxu0 0
    %519 = vmatprep.subr.bf16.mxu0 0
    %520 = vmatpush1.bf16.msra.mxu0 0
    %521 = vmatprep.subr.bf16.mxu0 0
    %522 = vmatpush1.bf16.msra.mxu0 0
    %523 = vmatprep.subr.bf16.mxu0 0
    %524 = vmatpush1.bf16.msra.mxu0 0
    %525 = vmatprep.subr.bf16.mxu0 0
    %526 = vmatpush1.bf16.msra.mxu0 0
    %527 = vmatprep.subr.bf16.mxu0 0
    %528 = vmatpush1.bf16.msra.mxu0 0
    %529 = vmatprep.subr.bf16.mxu0 0
    %530 = vmatpush1.bf16.msra.mxu0 0
    %531 = vmatprep.subr.bf16.mxu0 0
    %532 = vmatpush1.bf16.msra.mxu0 0
    %533 = vmatprep.subr.bf16.mxu0 0
    %534 = vmatpush1.bf16.msra.mxu0 0
    %535 = vmatprep.subr.bf16.mxu0 0
    %536 = vmatpush1.bf16.msra.mxu0 0
    %537 = vmatprep.subr.bf16.mxu0 0
    %538 = vmatpush1.bf16.msra.mxu0 0
    %539 = vmatprep.subr.bf16.mxu0 0
    %540 = vmatpush1.bf16.msra.mxu0 0
    %541 = vmatprep.subr.bf16.mxu0 0
    %542 = vmatpush1.bf16.msra.mxu0 0
    %543 = vmatprep.mubr.bf16.mxu0 0
    %544 = vmatmul.mubr.bf16.gmra.mrb[0].mxu0 %v509
    %v545 = vpop.f32.mrb[0].mxu0
    %v546 = vadd.f32 0.0, %v545
    %v547 = vpop.f32.mrb[0].mxu0
    %v548 = vpop.f32.mrb[0].mxu0
    %v549 = vadd.f32 0.0, %v548
    %v550 = vpop.f32.mrb[0].mxu0
    %551 = vdwg.mxu0
    %552 = vrot.lane.b32.xlu0 %v123, 64
    %v553 = vpop.permute.xlu0 %552
    %v556 = vsel %vm365, %v456, 0
    %558 = vmatprep.subr.bf16.mxu0 0
    %559 = vmatpush1.bf16.msra.mxu0 %v553
    %560 = vmatprep.subr.bf16.mxu0 0
    %561 = vmatpush1.bf16.msra.mxu0 0
    %562 = vmatprep.subr.bf16.mxu0 0
    %563 = vmatpush1.bf16.msra.mxu0 0
    %564 = vmatprep.subr.bf16.mxu0 0
    %565 = vmatpush1.bf16.msra.mxu0 0
    %566 = vmatprep.subr.bf16.mxu0 0
    %567 = vmatpush1.bf16.msra.mxu0 0
    %568 = vmatprep.subr.bf16.mxu0 0
    %569 = vmatpush1.bf16.msra.mxu0 0
    %570 = vmatprep.subr.bf16.mxu0 0
    %571 = vmatpush1.bf16.msra.mxu0 0
    %572 = vmatprep.subr.bf16.mxu0 0
    %573 = vmatpush1.bf16.msra.mxu0 0
    %574 = vmatprep.subr.bf16.mxu0 0
    %575 = vmatpush1.bf16.msra.mxu0 0
    %576 = vmatprep.subr.bf16.mxu0 0
    %577 = vmatpush1.bf16.msra.mxu0 0
    %578 = vmatprep.subr.bf16.mxu0 0
    %579 = vmatpush1.bf16.msra.mxu0 0
    %580 = vmatprep.subr.bf16.mxu0 0
    %581 = vmatpush1.bf16.msra.mxu0 0
    %582 = vmatprep.subr.bf16.mxu0 0
    %583 = vmatpush1.bf16.msra.mxu0 0
    %584 = vmatprep.subr.bf16.mxu0 0
    %585 = vmatpush1.bf16.msra.mxu0 0
    %586 = vmatprep.subr.bf16.mxu0 0
    %587 = vmatpush1.bf16.msra.mxu0 0
    %588 = vmatprep.subr.bf16.mxu0 0
    %589 = vmatpush1.bf16.msra.mxu0 0
    %590 = vmatprep.mubr.bf16.mxu0 0
    %591 = vmatmul.mubr.bf16.gmra.mrb[0].mxu0 %v556
    %v592 = vpop.f32.mrb[0].mxu0
    %v593 = vadd.f32 0.0, %v592
    %v594 = vpop.f32.mrb[0].mxu0
    %v595 = vpop.f32.mrb[0].mxu0
    %v596 = vadd.f32 0.0, %v595
    %v597 = vpop.f32.mrb[0].mxu0
    %598 = vdwg.mxu0
    %599 = vrot.lane.b32.xlu0 %v125, 64
    %v600 = vpop.permute.xlu0 %599
    %v603 = vsel %vm365, %v457, 0
    %605 = vmatprep.subr.bf16.mxu0 0
    %606 = vmatpush1.bf16.msra.mxu0 %v600
    %607 = vmatprep.subr.bf16.mxu0 0
    %608 = vmatpush1.bf16.msra.mxu0 0
    %609 = vmatprep.subr.bf16.mxu0 0
    %610 = vmatpush1.bf16.msra.mxu0 0
    %611 = vmatprep.subr.bf16.mxu0 0
    %612 = vmatpush1.bf16.msra.mxu0 0
    %613 = vmatprep.subr.bf16.mxu0 0
    %614 = vmatpush1.bf16.msra.mxu0 0
    %615 = vmatprep.subr.bf16.mxu0 0
    %616 = vmatpush1.bf16.msra.mxu0 0
    %617 = vmatprep.subr.bf16.mxu0 0
    %618 = vmatpush1.bf16.msra.mxu0 0
    %619 = vmatprep.subr.bf16.mxu0 0
    %620 = vmatpush1.bf16.msra.mxu0 0
    %621 = vmatprep.subr.bf16.mxu0 0
    %622 = vmatpush1.bf16.msra.mxu0 0
    %623 = vmatprep.subr.bf16.mxu0 0
    %624 = vmatpush1.bf16.msra.mxu0 0
    %625 = vmatprep.subr.bf16.mxu0 0
    %626 = vmatpush1.bf16.msra.mxu0 0
    %627 = vmatprep.subr.bf16.mxu0 0
    %628 = vmatpush1.bf16.msra.mxu0 0
    %629 = vmatprep.subr.bf16.mxu0 0
    %630 = vmatpush1.bf16.msra.mxu0 0
    %631 = vmatprep.subr.bf16.mxu0 0
    %632 = vmatpush1.bf16.msra.mxu0 0
    %633 = vmatprep.subr.bf16.mxu0 0
    %634 = vmatpush1.bf16.msra.mxu0 0
    %635 = vmatprep.subr.bf16.mxu0 0
    %636 = vmatpush1.bf16.msra.mxu0 0
    %637 = vmatprep.mubr.bf16.mxu0 0
    %638 = vmatmul.mubr.bf16.gmra.mrb[0].mxu0 %v603
    %v639 = vpop.f32.mrb[0].mxu0
    %v640 = vadd.f32 0.0, %v639
    %v641 = vpop.f32.mrb[0].mxu0
    %v642 = vpop.f32.mrb[0].mxu0
    %v643 = vadd.f32 0.0, %v642
    %v644 = vpop.f32.mrb[0].mxu0
    %645 = vdwg.mxu0
    %648 = vrot.lane.b32.xlu0 %v546, 8
    %v649 = vpop.permute.xlu0 %648
    %650 = vrot.lane.b32.xlu0 %v549, 8
    %v651 = vpop.permute.xlu0 %650
    %656 = vrot.lane.b32.xlu0 %v593, 16
    %v657 = vpop.permute.xlu0 %656
    %658 = vrot.lane.b32.xlu0 %v596, 16
    %v659 = vpop.permute.xlu0 %658
    %664 = vrot.lane.b32.xlu0 %v640, 24
    %v665 = vpop.permute.xlu0 %664
    %666 = vrot.lane.b32.xlu0 %v643, 24
    %v667 = vpop.permute.xlu0 %666
    %v670 = vsel %vm128, %v499, %v649
    %v671 = vsel %vm128, %v502, %v651
    %v672 = vsel %vm365, %v670, %v657
    %v673 = vsel %vm365, %v671, %v659
    %vm674 = vcmask 195584
    %v675 = vsel %vm674, %v672, %v665
    %v676 = vsel %vm674, %v673, %v667
    %v677 = vpack.c.bf16 %v676, %v675
    %678 = vrot.lane.b32.xlu0 %v69, 32
    %v679 = vpop.permute.xlu0 %678
    %680 = vrot.lane.b32.xlu0 %v70, 32
    %v681 = vpop.permute.xlu0 %680
    %684 = vrot.lane.b32.xlu0 %v59, 32
    %v685 = vpop.permute.xlu0 %684
    %v688 = vsel %vm73, %v677, 0
    %690 = vmatprep.subr.bf16.mxu0 0
    %691 = vmatpush1.bf16.msra.mxu0 %v679
    %692 = vmatprep.subr.bf16.mxu0 0
    %693 = vmatpush1.bf16.msra.mxu0 %v681
    %694 = vmatprep.subr.bf16.mxu0 0
    %695 = vmatpush1.bf16.msra.mxu0 0
    %696 = vmatprep.subr.bf16.mxu0 0
    %697 = vmatpush1.bf16.msra.mxu0 0
    %698 = vmatprep.subr.bf16.mxu0 0
    %699 = vmatpush1.bf16.msra.mxu0 0
    %700 = vmatprep.subr.bf16.mxu0 0
    %701 = vmatpush1.bf16.msra.mxu0 0
    %702 = vmatprep.subr.bf16.mxu0 0
    %703 = vmatpush1.bf16.msra.mxu0 0
    %704 = vmatprep.subr.bf16.mxu0 0
    %705 = vmatpush1.bf16.msra.mxu0 0
    %706 = vmatprep.subr.bf16.mxu0 0
    %707 = vmatpush1.bf16.msra.mxu0 0
    %708 = vmatprep.subr.bf16.mxu0 0
    %709 = vmatpush1.bf16.msra.mxu0 0
    %710 = vmatprep.subr.bf16.mxu0 0
    %711 = vmatpush1.bf16.msra.mxu0 0
    %712 = vmatprep.subr.bf16.mxu0 0
    %713 = vmatpush1.bf16.msra.mxu0 0
    %714 = vmatprep.subr.bf16.mxu0 0
    %715 = vmatpush1.bf16.msra.mxu0 0
    %716 = vmatprep.subr.bf16.mxu0 0
    %717 = vmatpush1.bf16.msra.mxu0 0
    %718 = vmatprep.subr.bf16.mxu0 0
    %719 = vmatpush1.bf16.msra.mxu0 0
    %720 = vmatprep.subr.bf16.mxu0 0
    %721 = vmatpush1.bf16.msra.mxu0 0
    %722 = vmatprep.mubr.bf16.mxu0 0
    %723 = vmatmul.mubr.bf16.gmra.mrb[0].mxu0 %v688
    %v724 = vpop.f32.mrb[0].mxu0
    %v725 = vadd.f32 %v685, %v724
    %v726 = vpop.f32.mrb[0].mxu0
    %v727 = vpop.f32.mrb[0].mxu0
    %v728 = vadd.f32 %v685, %v727
    %v729 = vpop.f32.mrb[0].mxu0
    %730 = vdwg.mxu0
    %731 = vst.msk [vmem:[#allocation7] sm:$0xff] %vm73, %v725
    %732 = vst.msk [vmem:[#allocation7 + $0x8] sm:$0xff] %vm73, %v728
    // Predicated region
    $region26: #{tpu_custom_call.1} parent=1 // pred_check
      _
    $region27: #{tpu_custom_call.1} parent=1 // pred_check_branch
      %734 = sbr.rel (0) target = $region29
    $region28: #{tpu_custom_call.1} parent=1 // pred_region
      %s736 = ssub.s32 256, 256
      %737 = vsyncadd [#allocation4], %s736
      %s738 = sshll.u32 [#allocation7], 4
      %s739 = int_to_ptr.vmem [resolvable:$true] %s738
      %744 = dma.vmem_to_hbm [thread:$0]  %s739, 256, %s4, [#allocation4], 128, 128, 8
    $region29: #{tpu_custom_call.1} parent=1 // pred_fallthru
      _
    // Predicated region
    $region30: #{tpu_custom_call.1} parent=1 // pred_check
      _
    $region31: #{tpu_custom_call.1} parent=1 // pred_check_branch
      %746 = sbr.rel (0) target = $region33
    $region32: #{tpu_custom_call.1} parent=1 // pred_region
      %747 = dma.done [#allocation4], 256
    $region33: #{tpu_custom_call.1} parent=1 // pred_fallthru
      _
    %748 = vsyncpa [#allocation3], 1
    %749 = vsyncpa [#allocation6], 1
    %750 = vsyncpa [#allocation4], 1

</llo_original>
